<compile_context>
chip_gen: v5e
topology: v5e:2x2
jax: 0.10.0
libtpu: 0.0.40
codegen_flags: <defaults>
</compile_context>

<pallas_src>
import jax
import jax.numpy as jnp
from jax.experimental import pallas as pl
from jax.experimental.pallas import tpu as pltpu


def _make_kernel(C, H, W, d, Nb, Wp, Lp):
    """Kernel for one grid step: Nb batch elements, each a lane-dense (C, Lp) slab."""
    shift_to_pad = d * Wp + d                           # top-corner -> padded coords
    tap_offs = [(ky * Wp + kx) * d for ky in range(3) for kx in range(3)]

    def conv3x3(x_flat, w_mat):
        # im2col on the flat lane axis: each tap is a static lane roll (XLU),
        # stacked to (9*C, Lp); a single MXU matmul per conv layer.
        cols = [pltpu.roll(x_flat, shift=(Lp - off) % Lp, axis=1)
                for off in tap_offs]
        xs = jnp.concatenate(cols, axis=0)              # (9*C, Lp)
        return jnp.dot(w_mat, xs, preferred_element_type=jnp.float32)

    def kernel(x_ref, w_ref, sb_ref, mask_ref, o_ref):
        w1 = w_ref[0]                                   # (C, 9*C)
        w2 = w_ref[1]
        scale1 = sb_ref[0]                              # (C, 1) — broadcasts on lanes
        bias1 = sb_ref[1]
        scale2 = sb_ref[2]
        bias2 = sb_ref[3]
        mask = mask_ref[...]                            # (1, Lp): 1.0 on valid HxW interior

        for n in range(Nb):                             # Nb is small: trace-time unroll
            x = x_ref[n]                                # (C, Lp) zero-padded input, flat
            # conv1 -> bn1 -> relu   (valid at top-corner flat coords p = h*Wp + w)
            y1 = conv3x3(x, w1)
            mid = jnp.maximum(y1 * scale1 + bias1, 0.0) * mask
            # TODO(synk): Dropout2d is identity (inference mode); training mode would
            # need pltpu.prng_random_bits + per-channel mask and 1/(1-p) scaling.
            # re-pad the masked interior into zero-padded coords for conv2 (one roll)
            mid_pad = pltpu.roll(mid, shift=shift_to_pad, axis=1)
            # conv2 -> bn2 -> +residual -> relu
            y2 = conv3x3(mid_pad, w2)
            res = pltpu.roll(x, shift=(Lp - shift_to_pad) % Lp, axis=1)
            o_ref[n] = jnp.maximum(y2 * scale2 + bias2 + res, 0.0)

    return kernel


def residual_block_forward(x, w1, w2, scale1, bias1, scale2, bias2,
                           dilation=1, batch_block=None):
    """x: (N, C, H, W) float32. Returns (N, C, H, W) float32."""
    N, C, H, W = x.shape
    d = dilation
    Hp, Wp = H + 2 * d, W + 2 * d
    L = Hp * Wp
    Lp = ((L + 127) // 128) * 128                       # lane-dense flat length

    if batch_block is None:
        batch_block = min(N, 8)
    assert N % batch_block == 0, "batch must divide batch_block"
    nb = batch_block

    # ---- plain-JAX glue: layout only, no compute ---------------------------
    x_pad = jnp.pad(x.astype(jnp.float32), ((0, 0), (0, 0), (d, d), (d, d)))
    x_flat = jnp.pad(x_pad.reshape(N, C, L), ((0, 0), (0, 0), (0, Lp - L)))

    def w_to_mat(w):    # (Co, Ci, 3, 3) -> (Co, 9*Ci), col index = (ky*3+kx)*Ci + ci
        return jnp.transpose(w, (0, 2, 3, 1)).reshape(C, 9 * C)

    w_mat = jnp.stack([w_to_mat(w1), w_to_mat(w2)]).astype(jnp.float32)   # (2, C, 9C)
    sb = jnp.stack([scale1, bias1, scale2, bias2]).astype(jnp.float32)
    sb = sb.reshape(4, C, 1)

    p = jnp.arange(Lp, dtype=jnp.int32)
    interior = ((p // Wp) < H) & ((p % Wp) < W)
    mask = interior.astype(jnp.float32).reshape(1, Lp)

    kernel = _make_kernel(C, H, W, d, nb, Wp, Lp)

    out_flat = pl.pallas_call(
        kernel,
        out_shape=jax.ShapeDtypeStruct((N, C, Lp), jnp.float32),
        grid_spec=pltpu.PrefetchScalarGridSpec(
            num_scalar_prefetch=0,
            grid=(N // nb,),
            in_specs=[
                pl.BlockSpec((nb, C, Lp), lambda b: (b, 0, 0)),       # x (flat, padded)
                pl.BlockSpec((2, C, 9 * C), lambda b: (0, 0, 0)),     # conv weights (VMEM)
                pl.BlockSpec((4, C, 1), lambda b: (0, 0, 0)),         # BN scale/bias
                pl.BlockSpec((1, Lp), lambda b: (0, 0)),              # interior mask
            ],
            out_specs=pl.BlockSpec((nb, C, Lp), lambda b: (b, 0, 0)),
        ),
        compiler_params=pltpu.CompilerParams(
            dimension_semantics=("parallel",)),
    )(x_flat, w_mat, sb, mask)

    # top-corner flat coords -> (N, C, H, W)
    out = out_flat[:, :, :L].reshape(N, C, Hp, Wp)[:, :, :H, :W]
    return out


def reference_forward(x, w1, w2, scale1, bias1, scale2, bias2, dilation=1):
    """Pure-JAX reference (eval-mode BN folded into scale/bias, dropout = id)."""
    dn = ("NCHW", "OIHW", "NCHW")
    d = dilation
    y = jax.lax.conv_general_dilated(
        x, w1, (1, 1), [(d, d), (d, d)], rhs_dilation=(d, d),
        dimension_numbers=dn)
    y = jax.nn.relu(y * scale1[None, :, None, None] + bias1[None, :, None, None])
    y = jax.lax.conv_general_dilated(
        y, w2, (1, 1), [(d, d), (d, d)], rhs_dilation=(d, d),
        dimension_numbers=dn)
    y = y * scale2[None, :, None, None] + bias2[None, :, None, None] + x
    return jax.nn.relu(y)


if __name__ == "__main__":
    N, C, H, W = 2, 4, 16, 16
    dilation = 1
    eps = 1e-5

    key = jax.random.PRNGKey(0)
    kx, kw1, kw2, kg1, kb1, km1, kv1, kg2, kb2, km2, kv2 = jax.random.split(key, 11)

    x = jax.random.normal(kx, (N, C, H, W), dtype=jnp.float32)

    # Deterministic synthetic parameters (shapes from nn.Conv2d / nn.BatchNorm2d).
    w1 = 0.2 * jax.random.normal(kw1, (C, C, 3, 3), dtype=jnp.float32)
    w2 = 0.2 * jax.random.normal(kw2, (C, C, 3, 3), dtype=jnp.float32)

    gamma1 = 1.0 + 0.1 * jax.random.normal(kg1, (C,), dtype=jnp.float32)
    beta1 = 0.1 * jax.random.normal(kb1, (C,), dtype=jnp.float32)
    mean1 = 0.1 * jax.random.normal(km1, (C,), dtype=jnp.float32)
    var1 = 1.0 + 0.1 * jnp.abs(jax.random.normal(kv1, (C,), dtype=jnp.float32))

    gamma2 = 1.0 + 0.1 * jax.random.normal(kg2, (C,), dtype=jnp.float32)
    beta2 = 0.1 * jax.random.normal(kb2, (C,), dtype=jnp.float32)
    mean2 = 0.1 * jax.random.normal(km2, (C,), dtype=jnp.float32)
    var2 = 1.0 + 0.1 * jnp.abs(jax.random.normal(kv2, (C,), dtype=jnp.float32))

    # Fold BN (inference) into per-channel scale/bias.
    scale1 = gamma1 / jnp.sqrt(var1 + eps)
    bias1 = beta1 - mean1 * scale1
    scale2 = gamma2 / jnp.sqrt(var2 + eps)
    bias2 = beta2 - mean2 * scale2

    out = residual_block_forward(x, w1, w2, scale1, bias1, scale2, bias2, dilation)
    out = jax.block_until_ready(out)

    ref = reference_forward(x, w1, w2, scale1, bias1, scale2, bias2, dilation)
    ref = jax.block_until_ready(ref)

    assert out.shape == (N, C, H, W)
    assert jnp.allclose(out, ref, rtol=1e-4, atol=1e-4), "mismatch vs reference"

    print("KERNEL_OK")
</pallas_src>

<mosaic_0001>
module attributes {stable_mosaic.version = 11 : i64} {
  func.func @kernel(%arg0: i32, %arg1: memref<2x4x384xf32, #tpu.memory_space<vmem>>, %arg2: memref<2x4x36xf32, #tpu.memory_space<vmem>>, %arg3: memref<4x4x1xf32, #tpu.memory_space<vmem>>, %arg4: memref<1x384xf32, #tpu.memory_space<vmem>>, %arg5: memref<2x4x384xf32, #tpu.memory_space<vmem>>) attributes {dimension_semantics = [#tpu.dimension_semantics<parallel>], iteration_bounds = array<i64: 1>, scalar_prefetch = 0 : i64, scratch_operands = 0 : i64, tpu.core_type = #tpu.core_type<tc>, window_params = [{transform_indices = @transform_0, window_bounds = array<i64: 2, 4, 384>}, {pipeline_mode = #tpu.pipeline_mode<synchronous>, transform_indices = @transform_1, window_bounds = array<i64: 2, 4, 36>}, {pipeline_mode = #tpu.pipeline_mode<synchronous>, transform_indices = @transform_2, window_bounds = array<i64: 4, 4, 1>}, {pipeline_mode = #tpu.pipeline_mode<synchronous>, transform_indices = @transform_3, window_bounds = array<i64: 1, 384>}, {transform_indices = @transform_4, window_bounds = array<i64: 2, 4, 384>}]} {
    %c0 = arith.constant 0 : index
    %c0_0 = arith.constant 0 : index
    %c0_1 = arith.constant 0 : index
    %0 = vector.load %arg2[%c0, %c0_0, %c0_1] : memref<2x4x36xf32, #tpu.memory_space<vmem>>, vector<1x4x36xf32>
    %1 = vector.shape_cast %0 : vector<1x4x36xf32> to vector<4x36xf32>
    %c1 = arith.constant 1 : index
    %c0_2 = arith.constant 0 : index
    %c0_3 = arith.constant 0 : index
    %2 = vector.load %arg2[%c1, %c0_2, %c0_3] : memref<2x4x36xf32, #tpu.memory_space<vmem>>, vector<1x4x36xf32>
    %3 = vector.shape_cast %2 : vector<1x4x36xf32> to vector<4x36xf32>
    %c0_4 = arith.constant 0 : index
    %c0_5 = arith.constant 0 : index
    %c0_6 = arith.constant 0 : index
    %4 = vector.load %arg3[%c0_4, %c0_5, %c0_6] : memref<4x4x1xf32, #tpu.memory_space<vmem>>, vector<1x4x1xf32>
    %5 = vector.shape_cast %4 : vector<1x4x1xf32> to vector<4x1xf32>
    %c1_7 = arith.constant 1 : index
    %c0_8 = arith.constant 0 : index
    %c0_9 = arith.constant 0 : index
    %6 = vector.load %arg3[%c1_7, %c0_8, %c0_9] : memref<4x4x1xf32, #tpu.memory_space<vmem>>, vector<1x4x1xf32>
    %7 = vector.shape_cast %6 : vector<1x4x1xf32> to vector<4x1xf32>
    %c2 = arith.constant 2 : index
    %c0_10 = arith.constant 0 : index
    %c0_11 = arith.constant 0 : index
    %8 = vector.load %arg3[%c2, %c0_10, %c0_11] : memref<4x4x1xf32, #tpu.memory_space<vmem>>, vector<1x4x1xf32>
    %9 = vector.shape_cast %8 : vector<1x4x1xf32> to vector<4x1xf32>
    %c3 = arith.constant 3 : index
    %c0_12 = arith.constant 0 : index
    %c0_13 = arith.constant 0 : index
    %10 = vector.load %arg3[%c3, %c0_12, %c0_13] : memref<4x4x1xf32, #tpu.memory_space<vmem>>, vector<1x4x1xf32>
    %11 = vector.shape_cast %10 : vector<1x4x1xf32> to vector<4x1xf32>
    %c0_14 = arith.constant 0 : index
    %c0_15 = arith.constant 0 : index
    %12 = vector.load %arg4[%c0_14, %c0_15] : memref<1x384xf32, #tpu.memory_space<vmem>>, vector<1x384xf32>
    %c0_16 = arith.constant 0 : index
    %c0_17 = arith.constant 0 : index
    %c0_18 = arith.constant 0 : index
    %13 = vector.load %arg1[%c0_16, %c0_17, %c0_18] : memref<2x4x384xf32, #tpu.memory_space<vmem>>, vector<1x4x384xf32>
    %14 = vector.shape_cast %13 : vector<1x4x384xf32> to vector<4x384xf32>
    %c0_i32 = arith.constant 0 : i32
    %15 = tpu.dynamic_rotate %14 by %c0_i32 dim 1 : vector<4x384xf32>, i32 -> vector<4x384xf32>
    %c383_i32 = arith.constant 383 : i32
    %16 = tpu.dynamic_rotate %14 by %c383_i32 dim 1 : vector<4x384xf32>, i32 -> vector<4x384xf32>
    %c382_i32 = arith.constant 382 : i32
    %17 = tpu.dynamic_rotate %14 by %c382_i32 dim 1 : vector<4x384xf32>, i32 -> vector<4x384xf32>
    %c366_i32 = arith.constant 366 : i32
    %18 = tpu.dynamic_rotate %14 by %c366_i32 dim 1 : vector<4x384xf32>, i32 -> vector<4x384xf32>
    %c365_i32 = arith.constant 365 : i32
    %19 = tpu.dynamic_rotate %14 by %c365_i32 dim 1 : vector<4x384xf32>, i32 -> vector<4x384xf32>
    %c364_i32 = arith.constant 364 : i32
    %20 = tpu.dynamic_rotate %14 by %c364_i32 dim 1 : vector<4x384xf32>, i32 -> vector<4x384xf32>
    %c348_i32 = arith.constant 348 : i32
    %21 = tpu.dynamic_rotate %14 by %c348_i32 dim 1 : vector<4x384xf32>, i32 -> vector<4x384xf32>
    %c347_i32 = arith.constant 347 : i32
    %22 = tpu.dynamic_rotate %14 by %c347_i32 dim 1 : vector<4x384xf32>, i32 -> vector<4x384xf32>
    %c346_i32 = arith.constant 346 : i32
    %23 = tpu.dynamic_rotate %14 by %c346_i32 dim 1 : vector<4x384xf32>, i32 -> vector<4x384xf32>
    %24 = tpu.concatenate %15, %16, %17, %18, %19, %20, %21, %22, %23 in 0 : vector<4x384xf32>, vector<4x384xf32>, vector<4x384xf32>, vector<4x384xf32>, vector<4x384xf32>, vector<4x384xf32>, vector<4x384xf32>, vector<4x384xf32>, vector<4x384xf32> -> vector<36x384xf32>
    %cst = arith.constant dense<0.000000e+00> : vector<4x384xf32>
    %25 = tpu.matmul %1, %24, %cst {dimension_numbers = #tpu.dot_dimension_numbers<[1], [0], [0], [1], [0, 0, 1, 1], [], []>} : vector<4x36xf32>, vector<36x384xf32>, vector<4x384xf32> -> vector<4x384xf32>
    %26 = vector.broadcast %5 : vector<4x1xf32> to vector<4x384xf32>
    %27 = arith.mulf %25, %26 : vector<4x384xf32>
    %28 = vector.broadcast %7 : vector<4x1xf32> to vector<4x384xf32>
    %29 = arith.addf %27, %28 : vector<4x384xf32>
    %cst_19 = arith.constant 0.000000e+00 : f32
    %30 = vector.broadcast %cst_19 : f32 to vector<4x384xf32>
    %31 = arith.maximumf %29, %30 : vector<4x384xf32>
    %32 = vector.broadcast %12 : vector<1x384xf32> to vector<4x384xf32>
    %33 = arith.mulf %31, %32 : vector<4x384xf32>
    %c19_i32 = arith.constant 19 : i32
    %34 = tpu.dynamic_rotate %33 by %c19_i32 dim 1 : vector<4x384xf32>, i32 -> vector<4x384xf32>
    %c0_i32_20 = arith.constant 0 : i32
    %35 = tpu.dynamic_rotate %34 by %c0_i32_20 dim 1 : vector<4x384xf32>, i32 -> vector<4x384xf32>
    %c383_i32_21 = arith.constant 383 : i32
    %36 = tpu.dynamic_rotate %34 by %c383_i32_21 dim 1 : vector<4x384xf32>, i32 -> vector<4x384xf32>
    %c382_i32_22 = arith.constant 382 : i32
    %37 = tpu.dynamic_rotate %34 by %c382_i32_22 dim 1 : vector<4x384xf32>, i32 -> vector<4x384xf32>
    %c366_i32_23 = arith.constant 366 : i32
    %38 = tpu.dynamic_rotate %34 by %c366_i32_23 dim 1 : vector<4x384xf32>, i32 -> vector<4x384xf32>
    %c365_i32_24 = arith.constant 365 : i32
    %39 = tpu.dynamic_rotate %34 by %c365_i32_24 dim 1 : vector<4x384xf32>, i32 -> vector<4x384xf32>
    %c364_i32_25 = arith.constant 364 : i32
    %40 = tpu.dynamic_rotate %34 by %c364_i32_25 dim 1 : vector<4x384xf32>, i32 -> vector<4x384xf32>
    %c348_i32_26 = arith.constant 348 : i32
    %41 = tpu.dynamic_rotate %34 by %c348_i32_26 dim 1 : vector<4x384xf32>, i32 -> vector<4x384xf32>
    %c347_i32_27 = arith.constant 347 : i32
    %42 = tpu.dynamic_rotate %34 by %c347_i32_27 dim 1 : vector<4x384xf32>, i32 -> vector<4x384xf32>
    %c346_i32_28 = arith.constant 346 : i32
    %43 = tpu.dynamic_rotate %34 by %c346_i32_28 dim 1 : vector<4x384xf32>, i32 -> vector<4x384xf32>
    %44 = tpu.concatenate %35, %36, %37, %38, %39, %40, %41, %42, %43 in 0 : vector<4x384xf32>, vector<4x384xf32>, vector<4x384xf32>, vector<4x384xf32>, vector<4x384xf32>, vector<4x384xf32>, vector<4x384xf32>, vector<4x384xf32>, vector<4x384xf32> -> vector<36x384xf32>
    %cst_29 = arith.constant dense<0.000000e+00> : vector<4x384xf32>
    %45 = tpu.matmul %3, %44, %cst_29 {dimension_numbers = #tpu.dot_dimension_numbers<[1], [0], [0], [1], [0, 0, 1, 1], [], []>} : vector<4x36xf32>, vector<36x384xf32>, vector<4x384xf32> -> vector<4x384xf32>
    %c365_i32_30 = arith.constant 365 : i32
    %46 = tpu.dynamic_rotate %14 by %c365_i32_30 dim 1 : vector<4x384xf32>, i32 -> vector<4x384xf32>
    %47 = vector.broadcast %9 : vector<4x1xf32> to vector<4x384xf32>
    %48 = arith.mulf %45, %47 : vector<4x384xf32>
    %49 = vector.broadcast %11 : vector<4x1xf32> to vector<4x384xf32>
    %50 = arith.addf %48, %49 : vector<4x384xf32>
    %51 = arith.addf %50, %46 : vector<4x384xf32>
    %cst_31 = arith.constant 0.000000e+00 : f32
    %52 = vector.broadcast %cst_31 : f32 to vector<4x384xf32>
    %53 = arith.maximumf %51, %52 : vector<4x384xf32>
    %c0_32 = arith.constant 0 : index
    %c0_33 = arith.constant 0 : index
    %c0_34 = arith.constant 0 : index
    %54 = vector.load %arg5[%c0_32, %c0_33, %c0_34] : memref<2x4x384xf32, #tpu.memory_space<vmem>>, vector<1x4x384xf32>
    %55 = vector.shape_cast %54 : vector<1x4x384xf32> to vector<4x384xf32>
    %56 = vector.shape_cast %53 : vector<4x384xf32> to vector<1x4x384xf32>
    tpu.vector_store %arg5[%c0_32, %c0_33, %c0_34], %56 {strides = array<i32>} : memref<2x4x384xf32, #tpu.memory_space<vmem>>, vector<1x4x384xf32>,
    %c1_35 = arith.constant 1 : index
    %c0_36 = arith.constant 0 : index
    %c0_37 = arith.constant 0 : index
    %57 = vector.load %arg1[%c1_35, %c0_36, %c0_37] : memref<2x4x384xf32, #tpu.memory_space<vmem>>, vector<1x4x384xf32>
    %58 = vector.shape_cast %57 : vector<1x4x384xf32> to vector<4x384xf32>
    %c0_i32_38 = arith.constant 0 : i32
    %59 = tpu.dynamic_rotate %58 by %c0_i32_38 dim 1 : vector<4x384xf32>, i32 -> vector<4x384xf32>
    %c383_i32_39 = arith.constant 383 : i32
    %60 = tpu.dynamic_rotate %58 by %c383_i32_39 dim 1 : vector<4x384xf32>, i32 -> vector<4x384xf32>
    %c382_i32_40 = arith.constant 382 : i32
    %61 = tpu.dynamic_rotate %58 by %c382_i32_40 dim 1 : vector<4x384xf32>, i32 -> vector<4x384xf32>
    %c366_i32_41 = arith.constant 366 : i32
    %62 = tpu.dynamic_rotate %58 by %c366_i32_41 dim 1 : vector<4x384xf32>, i32 -> vector<4x384xf32>
    %c365_i32_42 = arith.constant 365 : i32
    %63 = tpu.dynamic_rotate %58 by %c365_i32_42 dim 1 : vector<4x384xf32>, i32 -> vector<4x384xf32>
    %c364_i32_43 = arith.constant 364 : i32
    %64 = tpu.dynamic_rotate %58 by %c364_i32_43 dim 1 : vector<4x384xf32>, i32 -> vector<4x384xf32>
    %c348_i32_44 = arith.constant 348 : i32
    %65 = tpu.dynamic_rotate %58 by %c348_i32_44 dim 1 : vector<4x384xf32>, i32 -> vector<4x384xf32>
    %c347_i32_45 = arith.constant 347 : i32
    %66 = tpu.dynamic_rotate %58 by %c347_i32_45 dim 1 : vector<4x384xf32>, i32 -> vector<4x384xf32>
    %c346_i32_46 = arith.constant 346 : i32
    %67 = tpu.dynamic_rotate %58 by %c346_i32_46 dim 1 : vector<4x384xf32>, i32 -> vector<4x384xf32>
    %68 = tpu.concatenate %59, %60, %61, %62, %63, %64, %65, %66, %67 in 0 : vector<4x384xf32>, vector<4x384xf32>, vector<4x384xf32>, vector<4x384xf32>, vector<4x384xf32>, vector<4x384xf32>, vector<4x384xf32>, vector<4x384xf32>, vector<4x384xf32> -> vector<36x384xf32>
    %cst_47 = arith.constant dense<0.000000e+00> : vector<4x384xf32>
    %69 = tpu.matmul %1, %68, %cst_47 {dimension_numbers = #tpu.dot_dimension_numbers<[1], [0], [0], [1], [0, 0, 1, 1], [], []>} : vector<4x36xf32>, vector<36x384xf32>, vector<4x384xf32> -> vector<4x384xf32>
    %70 = vector.broadcast %5 : vector<4x1xf32> to vector<4x384xf32>
    %71 = arith.mulf %69, %70 : vector<4x384xf32>
    %72 = vector.broadcast %7 : vector<4x1xf32> to vector<4x384xf32>
    %73 = arith.addf %71, %72 : vector<4x384xf32>
    %cst_48 = arith.constant 0.000000e+00 : f32
    %74 = vector.broadcast %cst_48 : f32 to vector<4x384xf32>
    %75 = arith.maximumf %73, %74 : vector<4x384xf32>
    %76 = vector.broadcast %12 : vector<1x384xf32> to vector<4x384xf32>
    %77 = arith.mulf %75, %76 : vector<4x384xf32>
    %c19_i32_49 = arith.constant 19 : i32
    %78 = tpu.dynamic_rotate %77 by %c19_i32_49 dim 1 : vector<4x384xf32>, i32 -> vector<4x384xf32>
    %c0_i32_50 = arith.constant 0 : i32
    %79 = tpu.dynamic_rotate %78 by %c0_i32_50 dim 1 : vector<4x384xf32>, i32 -> vector<4x384xf32>
    %c383_i32_51 = arith.constant 383 : i32
    %80 = tpu.dynamic_rotate %78 by %c383_i32_51 dim 1 : vector<4x384xf32>, i32 -> vector<4x384xf32>
    %c382_i32_52 = arith.constant 382 : i32
    %81 = tpu.dynamic_rotate %78 by %c382_i32_52 dim 1 : vector<4x384xf32>, i32 -> vector<4x384xf32>
    %c366_i32_53 = arith.constant 366 : i32
    %82 = tpu.dynamic_rotate %78 by %c366_i32_53 dim 1 : vector<4x384xf32>, i32 -> vector<4x384xf32>
    %c365_i32_54 = arith.constant 365 : i32
    %83 = tpu.dynamic_rotate %78 by %c365_i32_54 dim 1 : vector<4x384xf32>, i32 -> vector<4x384xf32>
    %c364_i32_55 = arith.constant 364 : i32
    %84 = tpu.dynamic_rotate %78 by %c364_i32_55 dim 1 : vector<4x384xf32>, i32 -> vector<4x384xf32>
    %c348_i32_56 = arith.constant 348 : i32
    %85 = tpu.dynamic_rotate %78 by %c348_i32_56 dim 1 : vector<4x384xf32>, i32 -> vector<4x384xf32>
    %c347_i32_57 = arith.constant 347 : i32
    %86 = tpu.dynamic_rotate %78 by %c347_i32_57 dim 1 : vector<4x384xf32>, i32 -> vector<4x384xf32>
    %c346_i32_58 = arith.constant 346 : i32
    %87 = tpu.dynamic_rotate %78 by %c346_i32_58 dim 1 : vector<4x384xf32>, i32 -> vector<4x384xf32>
    %88 = tpu.concatenate %79, %80, %81, %82, %83, %84, %85, %86, %87 in 0 : vector<4x384xf32>, vector<4x384xf32>, vector<4x384xf32>, vector<4x384xf32>, vector<4x384xf32>, vector<4x384xf32>, vector<4x384xf32>, vector<4x384xf32>, vector<4x384xf32> -> vector<36x384xf32>
    %cst_59 = arith.constant dense<0.000000e+00> : vector<4x384xf32>
    %89 = tpu.matmul %3, %88, %cst_59 {dimension_numbers = #tpu.dot_dimension_numbers<[1], [0], [0], [1], [0, 0, 1, 1], [], []>} : vector<4x36xf32>, vector<36x384xf32>, vector<4x384xf32> -> vector<4x384xf32>
    %c365_i32_60 = arith.constant 365 : i32
    %90 = tpu.dynamic_rotate %58 by %c365_i32_60 dim 1 : vector<4x384xf32>, i32 -> vector<4x384xf32>
    %91 = vector.broadcast %9 : vector<4x1xf32> to vector<4x384xf32>
    %92 = arith.mulf %89, %91 : vector<4x384xf32>
    %93 = vector.broadcast %11 : vector<4x1xf32> to vector<4x384xf32>
    %94 = arith.addf %92, %93 : vector<4x384xf32>
    %95 = arith.addf %94, %90 : vector<4x384xf32>
    %cst_61 = arith.constant 0.000000e+00 : f32
    %96 = vector.broadcast %cst_61 : f32 to vector<4x384xf32>
    %97 = arith.maximumf %95, %96 : vector<4x384xf32>
    %c1_62 = arith.constant 1 : index
    %c0_63 = arith.constant 0 : index
    %c0_64 = arith.constant 0 : index
    %98 = vector.load %arg5[%c1_62, %c0_63, %c0_64] : memref<2x4x384xf32, #tpu.memory_space<vmem>>, vector<1x4x384xf32>
    %99 = vector.shape_cast %98 : vector<1x4x384xf32> to vector<4x384xf32>
    %100 = vector.shape_cast %97 : vector<4x384xf32> to vector<1x4x384xf32>
    tpu.vector_store %arg5[%c1_62, %c0_63, %c0_64], %100 {strides = array<i32>} : memref<2x4x384xf32, #tpu.memory_space<vmem>>, vector<1x4x384xf32>,
    return
  }
  func.func @transform_0(%arg0: i32) -> (i32, i32, i32) {
    %c0_i32 = arith.constant 0 : i32
    %c0_i32_0 = arith.constant 0 : i32
    %c0_i32_1 = arith.constant 0 : i32
    return %arg0, %c0_i32, %c0_i32_0 : i32, i32, i32
  }
  func.func @transform_1(%arg0: i32) -> (i32, i32, i32) {
    %c0_i32 = arith.constant 0 : i32
    %c0_i32_0 = arith.constant 0 : i32
    %c0_i32_1 = arith.constant 0 : i32
    %c0_i32_2 = arith.constant 0 : i32
    return %c0_i32, %c0_i32_0, %c0_i32_1 : i32, i32, i32
  }
  func.func @transform_2(%arg0: i32) -> (i32, i32, i32) {
    %c0_i32 = arith.constant 0 : i32
    %c0_i32_0 = arith.constant 0 : i32
    %c0_i32_1 = arith.constant 0 : i32
    %c0_i32_2 = arith.constant 0 : i32
    return %c0_i32, %c0_i32_0, %c0_i32_1 : i32, i32, i32
  }
  func.func @transform_3(%arg0: i32) -> (i32, i32) {
    %c0_i32 = arith.constant 0 : i32
    %c0_i32_0 = arith.constant 0 : i32
    %c0_i32_1 = arith.constant 0 : i32
    return %c0_i32, %c0_i32_0 : i32, i32
  }
  func.func @transform_4(%arg0: i32) -> (i32, i32, i32) {
    %c0_i32 = arith.constant 0 : i32
    %c0_i32_0 = arith.constant 0 : i32
    %c0_i32_1 = arith.constant 0 : i32
    return %arg0, %c0_i32, %c0_i32_0 : i32, i32, i32
  }
}

</mosaic_0001>

<llo_original>
// kernel: tpu_custom_call.1
$region0: #{tpu_custom_call.1}
  #allocation0 [shape = 'u32[]', space=smem, size = 0x4, offset = 0x4, fixed_abs, tag = 'smem constant byte address 0x4 - core index']
  #allocation1 [shape = 'u32[72,128]{1,0:T(1,128)}', space=vmem, size = 0x9000, scoped, tag = 'internal scratch']
  %s0 = inlined_call_operand.hbm [shape: f32[2,4,384], index: 0, kind: input, shape index: {}]
  %s1 = inlined_call_operand.vmem [shape: f32[2,4,36], index: 1, kind: input, shape index: {}]
  %s2 = inlined_call_operand.vmem [shape: f32[4,4,1], index: 2, kind: input, shape index: {}]
  %s3 = inlined_call_operand.vmem [shape: f32[1,384], index: 3, kind: input, shape index: {}]
  %s4 = inlined_call_operand.hbm [shape: f32[2,4,384], index: 4, kind: output, shape index: {}]
  %s5 = sld [smem:[#allocation0]]
  $region30: #{tpu_custom_call.1} parent=0
    _
  %s7 = ssub.s32 1, %s5
  %s8 = scalar_select 0, %s7, %s5
  $region1: #{tpu_custom_call.1} parent=0
    #allocation2 [shape = 'u8[12288]{0}', space=vmem, size = 0x3000, scoped, tag = 'input window, operand 0, single buffered']
    #allocation3 [shape = 's32[1]{0}', space=sflag, size = 0x4, scoped, tag = 'scoped memory for tpu_custom_call.1']
    #allocation4 [shape = 's32[1]{0}', space=sflag, size = 0x4, scoped, tag = 'scoped memory for tpu_custom_call.1']
    #allocation5 [shape = 'u8[12288]{0}', space=vmem, size = 0x3000, scoped, tag = 'output window, operand 0, single buffered']
    %9 = vsyncpa [#allocation3], 0
    %10 = vsyncpa [#allocation4], 0
    // Predicated region
    $region2: #{tpu_custom_call.1} parent=1 // pred_check
      _
    $region3: #{tpu_custom_call.1} parent=1 // pred_check_branch
      %12 = sbr.rel (0) target = $region5
    $region4: #{tpu_custom_call.1} parent=1 // pred_region
      %14 = vsyncadd [#allocation3], 0
      %s15 = sshll.u32 %s0, 4
      %s16 = int_to_ptr.hbm [resolvable:$true] %s15
      %s17 = sshll.u32 [#allocation2], 4
      %s18 = int_to_ptr.vmem [resolvable:$true] %s17
      %23 = dma.hbm_to_vmem [thread:$0]  %s16, 384, %s18, [#allocation3], 192, 192, 12
    $region5: #{tpu_custom_call.1} parent=1 // pred_fallthru
      _
    // Predicated region
    $region6: #{tpu_custom_call.1} parent=1 // pred_check
      _
    $region7: #{tpu_custom_call.1} parent=1 // pred_check_branch
      %25 = sbr.rel (0) target = $region9
    $region8: #{tpu_custom_call.1} parent=1 // pred_region
      _
    $region9: #{tpu_custom_call.1} parent=1 // pred_fallthru
      _
    // Predicated region
    $region10: #{tpu_custom_call.1} parent=1 // pred_check
      _
    $region11: #{tpu_custom_call.1} parent=1 // pred_check_branch
      %27 = sbr.rel (0) target = $region13
    $region12: #{tpu_custom_call.1} parent=1 // pred_region
      _
    $region13: #{tpu_custom_call.1} parent=1 // pred_fallthru
      _
    // Predicated region
    $region14: #{tpu_custom_call.1} parent=1 // pred_check
      _
    $region15: #{tpu_custom_call.1} parent=1 // pred_check_branch
      %29 = sbr.rel (0) target = $region17
    $region16: #{tpu_custom_call.1} parent=1 // pred_region
      _
    $region17: #{tpu_custom_call.1} parent=1 // pred_fallthru
      _
    // Predicated region
    $region18: #{tpu_custom_call.1} parent=1 // pred_check
      _
    $region19: #{tpu_custom_call.1} parent=1 // pred_check_branch
      %31 = sbr.rel (0) target = $region21
    $region20: #{tpu_custom_call.1} parent=1 // pred_region
      %33 = dma.done [#allocation3], 384
    $region21: #{tpu_custom_call.1} parent=1 // pred_fallthru
      _
    %v34 = vld [vmem:[%s1] sm:$0xf]
    %s35 = scalar_lea.vmem %s1, 4
    %v36 = vld [vmem:[%s35] sm:$0xf]
    %v37 = vld [vmem:[%s2] sm:$0xf]
    %s38 = scalar_lea.vmem %s2, 4
    %v39 = vld [vmem:[%s38] sm:$0xf]
    %s40 = scalar_lea.vmem %s2, 8
    %v41 = vld [vmem:[%s40] sm:$0xf]
    %s42 = scalar_lea.vmem %s2, 12
    %v43 = vld [vmem:[%s42] sm:$0xf]
    %v44 = vld [vmem:[%s3] sm:$0x7]
    %v45 = vld [vmem:[#allocation2] sm:$0xff]
    %v46 = vld [vmem:[#allocation2 + $0x8] sm:$0xf]
    %49 = vst [vmem:[#allocation1] ss:$2 sm:$0xff] %v45
    %s50 = scalar_lea.vmem [#allocation1], 16
    %51 = vst [vmem:[%s50] ss:$2 sm:$0xff] %v46
    %v52 = vld.sshfl [vmem:[#allocation1] sm:$0xff pattern:$0x75316420]
    %v53 = vld.sshfl [vmem:[#allocation1 + $0x8] sm:$0xff pattern:$0x75316420]
    %v54 = vld.sshfl [vmem:[#allocation1 + $0x10] sm:$0xff pattern:$0x75316420]
    %58 = vst [vmem:[#allocation1] ss:$2 sm:$0xff] %v45
    %s59 = scalar_lea.vmem [#allocation1], 16
    %60 = vst [vmem:[%s59] ss:$2 sm:$0xff] %v46
    %v61 = vld.sshfl [vmem:[#allocation1] sm:$0xff pattern:$0x75316420]
    %v62 = vld.sshfl [vmem:[#allocation1 + $0x8] sm:$0xff pattern:$0x75316420]
    %v63 = vld.sshfl [vmem:[#allocation1 + $0x10] sm:$0xff pattern:$0x75316420]
    %67 = vrot.lane.b32.xlu0 %v61, 127
    %v68 = vpop.permute.xlu0 %67
    %69 = vrot.lane.b32.xlu0 %v62, 127
    %v70 = vpop.permute.xlu0 %69
    %71 = vrot.lane.b32.xlu0 %v63, 127
    %v72 = vpop.permute.xlu0 %71
    %v73 = vlaneseq
    %v74 = vand.u32 %v73, 127
    %vm75 = vcmp.lt.s32.totalorder %v74, 127
    %v76 = vsel %vm75, %v70, %v72
    %v77 = vsel %vm75, %v68, %v70
    %v78 = vsel %vm75, %v72, %v68
    %79 = vst [vmem:[#allocation1] ss:$2 sm:$0xff] %v45
    %s80 = scalar_lea.vmem [#allocation1], 16
    %81 = vst [vmem:[%s80] ss:$2 sm:$0xff] %v46
    %v82 = vld.sshfl [vmem:[#allocation1] sm:$0xff pattern:$0x75316420]
    %v83 = vld.sshfl [vmem:[#allocation1 + $0x8] sm:$0xff pattern:$0x75316420]
    %v84 = vld.sshfl [vmem:[#allocation1 + $0x10] sm:$0xff pattern:$0x75316420]
    %88 = vrot.lane.b32.xlu0 %v82, 126
    %v89 = vpop.permute.xlu0 %88
    %90 = vrot.lane.b32.xlu0 %v83, 126
    %v91 = vpop.permute.xlu0 %90
    %92 = vrot.lane.b32.xlu0 %v84, 126
    %v93 = vpop.permute.xlu0 %92
    %vm94 = vcmp.lt.s32.totalorder %v74, 126
    %v95 = vsel %vm94, %v91, %v93
    %v96 = vsel %vm94, %v89, %v91
    %v97 = vsel %vm94, %v93, %v89
    %98 = vst [vmem:[#allocation1] ss:$2 sm:$0xff] %v45
    %s99 = scalar_lea.vmem [#allocation1], 16
    %100 = vst [vmem:[%s99] ss:$2 sm:$0xff] %v46
    %v101 = vld.sshfl [vmem:[#allocation1] sm:$0xff pattern:$0x75316420]
    %v102 = vld.sshfl [vmem:[#allocation1 + $0x8] sm:$0xff pattern:$0x75316420]
    %v103 = vld.sshfl [vmem:[#allocation1 + $0x10] sm:$0xff pattern:$0x75316420]
    %107 = vrot.lane.b32.xlu0 %v101, 110
    %v108 = vpop.permute.xlu0 %107
    %109 = vrot.lane.b32.xlu0 %v102, 110
    %v110 = vpop.permute.xlu0 %109
    %111 = vrot.lane.b32.xlu0 %v103, 110
    %v112 = vpop.permute.xlu0 %111
    %vm113 = vcmp.lt.s32.totalorder %v74, 110
    %v114 = vsel %vm113, %v110, %v112
    %v115 = vsel %vm113, %v108, %v110
    %v116 = vsel %vm113, %v112, %v108
    %117 = vst [vmem:[#allocation1] ss:$2 sm:$0xff] %v45
    %s118 = scalar_lea.vmem [#allocation1], 16
    %119 = vst [vmem:[%s118] ss:$2 sm:$0xff] %v46
    %v120 = vld.sshfl [vmem:[#allocation1] sm:$0xff pattern:$0x75316420]
    %v121 = vld.sshfl [vmem:[#allocation1 + $0x8] sm:$0xff pattern:$0x75316420]
    %v122 = vld.sshfl [vmem:[#allocation1 + $0x10] sm:$0xff pattern:$0x75316420]
    %126 = vrot.lane.b32.xlu0 %v120, 109
    %v127 = vpop.permute.xlu0 %126
    %128 = vrot.lane.b32.xlu0 %v121, 109
    %v129 = vpop.permute.xlu0 %128
    %130 = vrot.lane.b32.xlu0 %v122, 109
    %v131 = vpop.permute.xlu0 %130
    %vm132 = vcmp.lt.s32.totalorder %v74, 109
    %v133 = vsel %vm132, %v129, %v131
    %v134 = vsel %vm132, %v127, %v129
    %v135 = vsel %vm132, %v131, %v127
    %136 = vst [vmem:[#allocation1] ss:$2 sm:$0xff] %v45
    %s137 = scalar_lea.vmem [#allocation1], 16
    %138 = vst [vmem:[%s137] ss:$2 sm:$0xff] %v46
    %v139 = vld.sshfl [vmem:[#allocation1] sm:$0xff pattern:$0x75316420]
    %v140 = vld.sshfl [vmem:[#allocation1 + $0x8] sm:$0xff pattern:$0x75316420]
    %v141 = vld.sshfl [vmem:[#allocation1 + $0x10] sm:$0xff pattern:$0x75316420]
    %145 = vrot.lane.b32.xlu0 %v139, 108
    %v146 = vpop.permute.xlu0 %145
    %147 = vrot.lane.b32.xlu0 %v140, 108
    %v148 = vpop.permute.xlu0 %147
    %149 = vrot.lane.b32.xlu0 %v141, 108
    %v150 = vpop.permute.xlu0 %149
    %vm151 = vcmp.lt.s32.totalorder %v74, 108
    %v152 = vsel %vm151, %v148, %v150
    %v153 = vsel %vm151, %v146, %v148
    %v154 = vsel %vm151, %v150, %v146
    %155 = vst [vmem:[#allocation1] ss:$2 sm:$0xff] %v45
    %s156 = scalar_lea.vmem [#allocation1], 16
    %157 = vst [vmem:[%s156] ss:$2 sm:$0xff] %v46
    %v158 = vld.sshfl [vmem:[#allocation1] sm:$0xff pattern:$0x75316420]
    %v159 = vld.sshfl [vmem:[#allocation1 + $0x8] sm:$0xff pattern:$0x75316420]
    %v160 = vld.sshfl [vmem:[#allocation1 + $0x10] sm:$0xff pattern:$0x75316420]
    %164 = vrot.lane.b32.xlu0 %v158, 92
    %v165 = vpop.permute.xlu0 %164
    %166 = vrot.lane.b32.xlu0 %v159, 92
    %v167 = vpop.permute.xlu0 %166
    %168 = vrot.lane.b32.xlu0 %v160, 92
    %v169 = vpop.permute.xlu0 %168
    %vm170 = vcmp.lt.s32.totalorder %v74, 92
    %v171 = vsel %vm170, %v167, %v169
    %v172 = vsel %vm170, %v165, %v167
    %v173 = vsel %vm170, %v169, %v165
    %174 = vst [vmem:[#allocation1] ss:$2 sm:$0xff] %v45
    %s175 = scalar_lea.vmem [#allocation1], 16
    %176 = vst [vmem:[%s175] ss:$2 sm:$0xff] %v46
    %v177 = vld.sshfl [vmem:[#allocation1] sm:$0xff pattern:$0x75316420]
    %v178 = vld.sshfl [vmem:[#allocation1 + $0x8] sm:$0xff pattern:$0x75316420]
    %v179 = vld.sshfl [vmem:[#allocation1 + $0x10] sm:$0xff pattern:$0x75316420]
    %183 = vrot.lane.b32.xlu0 %v177, 91
    %v184 = vpop.permute.xlu0 %183
    %185 = vrot.lane.b32.xlu0 %v178, 91
    %v186 = vpop.permute.xlu0 %185
    %187 = vrot.lane.b32.xlu0 %v179, 91
    %v188 = vpop.permute.xlu0 %187
    %vm189 = vcmp.lt.s32.totalorder %v74, 91
    %v190 = vsel %vm189, %v186, %v188
    %v191 = vsel %vm189, %v184, %v186
    %v192 = vsel %vm189, %v188, %v184
    %193 = vst [vmem:[#allocation1] ss:$2 sm:$0xff] %v45
    %s194 = scalar_lea.vmem [#allocation1], 16
    %195 = vst [vmem:[%s194] ss:$2 sm:$0xff] %v46
    %v196 = vld.sshfl [vmem:[#allocation1] sm:$0xff pattern:$0x75316420]
    %v197 = vld.sshfl [vmem:[#allocation1 + $0x8] sm:$0xff pattern:$0x75316420]
    %v198 = vld.sshfl [vmem:[#allocation1 + $0x10] sm:$0xff pattern:$0x75316420]
    %202 = vrot.lane.b32.xlu0 %v196, 90
    %v203 = vpop.permute.xlu0 %202
    %204 = vrot.lane.b32.xlu0 %v197, 90
    %v205 = vpop.permute.xlu0 %204
    %206 = vrot.lane.b32.xlu0 %v198, 90
    %v207 = vpop.permute.xlu0 %206
    %vm208 = vcmp.lt.s32.totalorder %v74, 90
    %v209 = vsel %vm208, %v205, %v207
    %v210 = vsel %vm208, %v203, %v205
    %v211 = vsel %vm208, %v207, %v203
    %v215 = vrot.slane %v77, 4
    %v216 = vrot.slane %v76, 4
    %v217 = vrot.slane %v78, 4
    %v224 = vrot.slane %v115, 4
    %v225 = vrot.slane %v114, 4
    %v226 = vrot.slane %v116, 4
    %v233 = vrot.slane %v153, 4
    %v234 = vrot.slane %v152, 4
    %v235 = vrot.slane %v154, 4
    %v242 = vrot.slane %v191, 4
    %v243 = vrot.slane %v190, 4
    %v244 = vrot.slane %v192, 4
    %vm248 = vcmask 1043456
    %v249 = vsel %vm248, %v52, %v215
    %v250 = vsel %vm248, %v53, %v216
    %v251 = vsel %vm248, %v54, %v217
    %v252 = vsel %vm248, %v96, %v224
    %v253 = vsel %vm248, %v95, %v225
    %v254 = vsel %vm248, %v97, %v226
    %v255 = vsel %vm248, %v134, %v233
    %v256 = vsel %vm248, %v133, %v234
    %v257 = vsel %vm248, %v135, %v235
    %v258 = vsel %vm248, %v172, %v242
    %v259 = vsel %vm248, %v171, %v243
    %v260 = vsel %vm248, %v173, %v244
    %vm261 = vcmask 293888
    %v263 = vsel %vm261, %v34, 0
    %v266 = vsel %vm248, %v210, 0
    %v269 = vsel %vm248, %v209, 0
    %v272 = vsel %vm248, %v211, 0
    %274 = vmatpush.msra.mxu0 0.0
    %275 = vmatpush.msra.mxu0 0.0
    %276 = vmatpush.msra.mxu0 0.0
    %277 = vmatpush.msra.mxu0 0.0
    %278 = vmatpush.msra.mxu0 0.0
    %279 = vmatpush.msra.mxu0 0.0
    %280 = vmatpush.msra.mxu0 0.0
    %281 = vmatpush.msra.mxu0 0.0
    %282 = vmatpush.msra.mxu0 0.0
    %283 = vmatpush.msra.mxu0 0.0
    %284 = vmatpush.msra.mxu0 0.0
    %285 = vmatpush.msra.mxu0 %v266
    %286 = vmatpush.msra.mxu0 %v258
    %287 = vmatpush.msra.mxu0 %v255
    %288 = vmatpush.msra.mxu0 %v252
    %289 = vmatpush.msra.mxu0 %v249
    %290 = vmatmul.f32.gmra.mxu0 %v263
    %v291 = vpop.f32.mrf.mxu0
    %v292 = vadd.f32 0.0, %v291
    %293 = vdwg.mxu0
    %294 = vmatpush.msra.mxu0 0.0
    %295 = vmatpush.msra.mxu0 0.0
    %296 = vmatpush.msra.mxu0 0.0
    %297 = vmatpush.msra.mxu0 0.0
    %298 = vmatpush.msra.mxu0 0.0
    %299 = vmatpush.msra.mxu0 0.0
    %300 = vmatpush.msra.mxu0 0.0
    %301 = vmatpush.msra.mxu0 0.0
    %302 = vmatpush.msra.mxu0 0.0
    %303 = vmatpush.msra.mxu0 0.0
    %304 = vmatpush.msra.mxu0 0.0
    %305 = vmatpush.msra.mxu0 %v269
    %306 = vmatpush.msra.mxu0 %v259
    %307 = vmatpush.msra.mxu0 %v256
    %308 = vmatpush.msra.mxu0 %v253
    %309 = vmatpush.msra.mxu0 %v250
    %310 = vmatmul.f32.gmra.mxu0 %v263
    %v311 = vpop.f32.mrf.mxu0
    %v312 = vadd.f32 0.0, %v311
    %313 = vdwg.mxu0
    %314 = vmatpush.msra.mxu0 0.0
    %315 = vmatpush.msra.mxu0 0.0
    %316 = vmatpush.msra.mxu0 0.0
    %317 = vmatpush.msra.mxu0 0.0
    %318 = vmatpush.msra.mxu0 0.0
    %319 = vmatpush.msra.mxu0 0.0
    %320 = vmatpush.msra.mxu0 0.0
    %321 = vmatpush.msra.mxu0 0.0
    %322 = vmatpush.msra.mxu0 0.0
    %323 = vmatpush.msra.mxu0 0.0
    %324 = vmatpush.msra.mxu0 0.0
    %325 = vmatpush.msra.mxu0 %v272
    %326 = vmatpush.msra.mxu0 %v260
    %327 = vmatpush.msra.mxu0 %v257
    %328 = vmatpush.msra.mxu0 %v254
    %329 = vmatpush.msra.mxu0 %v251
    %330 = vmatmul.f32.gmra.mxu0 %v263
    %v331 = vpop.f32.mrf.mxu0
    %v332 = vadd.f32 0.0, %v331
    %333 = vdwg.mxu0
    %335 = vset.pattern.permute.xlu0 0
    %336 = vperm.xlu0 %335, %v37
    %v337 = vpop.permute.xlu0 %336
    %v339 = vmul.f32 %v292, %v337
    %v340 = vmul.f32 %v312, %v337
    %v341 = vmul.f32 %v332, %v337
    %343 = vset.pattern.permute.xlu0 0
    %344 = vperm.xlu0 %343, %v39
    %v345 = vpop.permute.xlu0 %344
    %v347 = vadd.f32 %v339, %v345
    %v348 = vadd.f32 %v340, %v345
    %v349 = vadd.f32 %v341, %v345
    %v350 = vmax.f32 %v347, 0.0
    %v351 = vmax.f32 %v348, 0.0
    %v352 = vmax.f32 %v349, 0.0
    %v354 = vperm.slane %v44, 0
    %v355 = vperm.slane %v44, 1
    %v356 = vperm.slane %v44, 2
    %v360 = vmul.f32 %v350, %v354
    %v361 = vmul.f32 %v351, %v355
    %v362 = vmul.f32 %v352, %v356
    %363 = vrot.lane.b32.xlu0 %v360, 19
    %v364 = vpop.permute.xlu0 %363
    %365 = vrot.lane.b32.xlu0 %v361, 19
    %v366 = vpop.permute.xlu0 %365
    %367 = vrot.lane.b32.xlu0 %v362, 19
    %v368 = vpop.permute.xlu0 %367
    %vm369 = vcmp.lt.s32.totalorder %v74, 19
    %v370 = vsel %vm369, %v366, %v368
    %v371 = vsel %vm369, %v364, %v366
    %v372 = vsel %vm369, %v368, %v364
    %373 = vrot.lane.b32.xlu0 %v372, 127
    %v374 = vpop.permute.xlu0 %373
    %375 = vrot.lane.b32.xlu0 %v371, 127
    %v376 = vpop.permute.xlu0 %375
    %377 = vrot.lane.b32.xlu0 %v370, 127
    %v378 = vpop.permute.xlu0 %377
    %v379 = vsel %vm75, %v376, %v378
    %v380 = vsel %vm75, %v374, %v376
    %v381 = vsel %vm75, %v378, %v374
    %382 = vrot.lane.b32.xlu0 %v372, 126
    %v383 = vpop.permute.xlu0 %382
    %384 = vrot.lane.b32.xlu0 %v371, 126
    %v385 = vpop.permute.xlu0 %384
    %386 = vrot.lane.b32.xlu0 %v370, 126
    %v387 = vpop.permute.xlu0 %386
    %v388 = vsel %vm94, %v385, %v387
    %v389 = vsel %vm94, %v383, %v385
    %v390 = vsel %vm94, %v387, %v383
    %391 = vrot.lane.b32.xlu0 %v372, 110
    %v392 = vpop.permute.xlu0 %391
    %393 = vrot.lane.b32.xlu0 %v371, 110
    %v394 = vpop.permute.xlu0 %393
    %395 = vrot.lane.b32.xlu0 %v370, 110
    %v396 = vpop.permute.xlu0 %395
    %v397 = vsel %vm113, %v394, %v396
    %v398 = vsel %vm113, %v392, %v394
    %v399 = vsel %vm113, %v396, %v392
    %400 = vrot.lane.b32.xlu0 %v372, 109
    %v401 = vpop.permute.xlu0 %400
    %402 = vrot.lane.b32.xlu0 %v371, 109
    %v403 = vpop.permute.xlu0 %402
    %404 = vrot.lane.b32.xlu0 %v370, 109
    %v405 = vpop.permute.xlu0 %404
    %v406 = vsel %vm132, %v403, %v405
    %v407 = vsel %vm132, %v401, %v403
    %v408 = vsel %vm132, %v405, %v401
    %409 = vrot.lane.b32.xlu0 %v372, 108
    %v410 = vpop.permute.xlu0 %409
    %411 = vrot.lane.b32.xlu0 %v371, 108
    %v412 = vpop.permute.xlu0 %411
    %413 = vrot.lane.b32.xlu0 %v370, 108
    %v414 = vpop.permute.xlu0 %413
    %v415 = vsel %vm151, %v412, %v414
    %v416 = vsel %vm151, %v410, %v412
    %v417 = vsel %vm151, %v414, %v410
    %418 = vrot.lane.b32.xlu0 %v372, 92
    %v419 = vpop.permute.xlu0 %418
    %420 = vrot.lane.b32.xlu0 %v371, 92
    %v421 = vpop.permute.xlu0 %420
    %422 = vrot.lane.b32.xlu0 %v370, 92
    %v423 = vpop.permute.xlu0 %422
    %v424 = vsel %vm170, %v421, %v423
    %v425 = vsel %vm170, %v419, %v421
    %v426 = vsel %vm170, %v423, %v419
    %427 = vrot.lane.b32.xlu0 %v372, 91
    %v428 = vpop.permute.xlu0 %427
    %429 = vrot.lane.b32.xlu0 %v371, 91
    %v430 = vpop.permute.xlu0 %429
    %431 = vrot.lane.b32.xlu0 %v370, 91
    %v432 = vpop.permute.xlu0 %431
    %v433 = vsel %vm189, %v430, %v432
    %v434 = vsel %vm189, %v428, %v430
    %v435 = vsel %vm189, %v432, %v428
    %436 = vrot.lane.b32.xlu0 %v372, 90
    %v437 = vpop.permute.xlu0 %436
    %438 = vrot.lane.b32.xlu0 %v371, 90
    %v439 = vpop.permute.xlu0 %438
    %440 = vrot.lane.b32.xlu0 %v370, 90
    %v441 = vpop.permute.xlu0 %440
    %v442 = vsel %vm208, %v439, %v441
    %v443 = vsel %vm208, %v437, %v439
    %v444 = vsel %vm208, %v441, %v437
    %v448 = vrot.slane %v380, 4
    %v449 = vrot.slane %v379, 4
    %v450 = vrot.slane %v381, 4
    %v457 = vrot.slane %v398, 4
    %v458 = vrot.slane %v397, 4
    %v459 = vrot.slane %v399, 4
    %v466 = vrot.slane %v416, 4
    %v467 = vrot.slane %v415, 4
    %v468 = vrot.slane %v417, 4
    %v475 = vrot.slane %v434, 4
    %v476 = vrot.slane %v433, 4
    %v477 = vrot.slane %v435, 4
    %v481 = vsel %vm248, %v372, %v448
    %v482 = vsel %vm248, %v371, %v449
    %v483 = vsel %vm248, %v370, %v450
    %v484 = vsel %vm248, %v389, %v457
    %v485 = vsel %vm248, %v388, %v458
    %v486 = vsel %vm248, %v390, %v459
    %v487 = vsel %vm248, %v407, %v466
    %v488 = vsel %vm248, %v406, %v467
    %v489 = vsel %vm248, %v408, %v468
    %v490 = vsel %vm248, %v425, %v475
    %v491 = vsel %vm248, %v424, %v476
    %v492 = vsel %vm248, %v426, %v477
    %v494 = vsel %vm261, %v36, 0
    %v497 = vsel %vm248, %v443, 0
    %v500 = vsel %vm248, %v442, 0
    %v503 = vsel %vm248, %v444, 0
    %505 = vmatpush.msra.mxu0 0.0
    %506 = vmatpush.msra.mxu0 0.0
    %507 = vmatpush.msra.mxu0 0.0
    %508 = vmatpush.msra.mxu0 0.0
    %509 = vmatpush.msra.mxu0 0.0
    %510 = vmatpush.msra.mxu0 0.0
    %511 = vmatpush.msra.mxu0 0.0
    %512 = vmatpush.msra.mxu0 0.0
    %513 = vmatpush.msra.mxu0 0.0
    %514 = vmatpush.msra.mxu0 0.0
    %515 = vmatpush.msra.mxu0 0.0
    %516 = vmatpush.msra.mxu0 %v497
    %517 = vmatpush.msra.mxu0 %v490
    %518 = vmatpush.msra.mxu0 %v487
    %519 = vmatpush.msra.mxu0 %v484
    %520 = vmatpush.msra.mxu0 %v481
    %521 = vmatmul.f32.gmra.mxu0 %v494
    %v522 = vpop.f32.mrf.mxu0
    %v523 = vadd.f32 0.0, %v522
    %524 = vdwg.mxu0
    %525 = vmatpush.msra.mxu0 0.0
    %526 = vmatpush.msra.mxu0 0.0
    %527 = vmatpush.msra.mxu0 0.0
    %528 = vmatpush.msra.mxu0 0.0
    %529 = vmatpush.msra.mxu0 0.0
    %530 = vmatpush.msra.mxu0 0.0
    %531 = vmatpush.msra.mxu0 0.0
    %532 = vmatpush.msra.mxu0 0.0
    %533 = vmatpush.msra.mxu0 0.0
    %534 = vmatpush.msra.mxu0 0.0
    %535 = vmatpush.msra.mxu0 0.0
    %536 = vmatpush.msra.mxu0 %v500
    %537 = vmatpush.msra.mxu0 %v491
    %538 = vmatpush.msra.mxu0 %v488
    %539 = vmatpush.msra.mxu0 %v485
    %540 = vmatpush.msra.mxu0 %v482
    %541 = vmatmul.f32.gmra.mxu0 %v494
    %v542 = vpop.f32.mrf.mxu0
    %v543 = vadd.f32 0.0, %v542
    %544 = vdwg.mxu0
    %545 = vmatpush.msra.mxu0 0.0
    %546 = vmatpush.msra.mxu0 0.0
    %547 = vmatpush.msra.mxu0 0.0
    %548 = vmatpush.msra.mxu0 0.0
    %549 = vmatpush.msra.mxu0 0.0
    %550 = vmatpush.msra.mxu0 0.0
    %551 = vmatpush.msra.mxu0 0.0
    %552 = vmatpush.msra.mxu0 0.0
    %553 = vmatpush.msra.mxu0 0.0
    %554 = vmatpush.msra.mxu0 0.0
    %555 = vmatpush.msra.mxu0 0.0
    %556 = vmatpush.msra.mxu0 %v503
    %557 = vmatpush.msra.mxu0 %v492
    %558 = vmatpush.msra.mxu0 %v489
    %559 = vmatpush.msra.mxu0 %v486
    %560 = vmatpush.msra.mxu0 %v483
    %561 = vmatmul.f32.gmra.mxu0 %v494
    %v562 = vpop.f32.mrf.mxu0
    %v563 = vadd.f32 0.0, %v562
    %564 = vdwg.mxu0
    %566 = vset.pattern.permute.xlu0 0
    %567 = vperm.xlu0 %566, %v41
    %v568 = vpop.permute.xlu0 %567
    %v570 = vmul.f32 %v523, %v568
    %v571 = vmul.f32 %v543, %v568
    %v572 = vmul.f32 %v563, %v568
    %574 = vset.pattern.permute.xlu0 0
    %575 = vperm.xlu0 %574, %v43
    %v576 = vpop.permute.xlu0 %575
    %v578 = vadd.f32 %v570, %v576
    %v579 = vadd.f32 %v571, %v576
    %v580 = vadd.f32 %v572, %v576
    %v581 = vadd.f32 %v578, %v134
    %v582 = vadd.f32 %v579, %v133
    %v583 = vadd.f32 %v580, %v135
    %v584 = vmax.f32 %v581, 0.0
    %v585 = vmax.f32 %v582, 0.0
    %v586 = vmax.f32 %v583, 0.0
    %v589 = vrot.slane %v585, 4
    %v590 = vsel %vm248, %v584, %v589
    %592 = vst [vmem:[#allocation5] sm:$0xff] %v590
    %593 = vst [vmem:[#allocation5 + $0x8] sm:$0xf] %v586
    %s594 = scalar_lea.vmem [#allocation2], 12
    %v595 = vld [vmem:[%s594] sm:$0xff]
    %v596 = vld [vmem:[%s594 + $0x8] sm:$0xf]
    %599 = vst [vmem:[#allocation1] ss:$2 sm:$0xff] %v595
    %s600 = scalar_lea.vmem [#allocation1], 16
    %601 = vst [vmem:[%s600] ss:$2 sm:$0xff] %v596
    %v602 = vld.sshfl [vmem:[#allocation1] sm:$0xff pattern:$0x75316420]
    %v603 = vld.sshfl [vmem:[#allocation1 + $0x8] sm:$0xff pattern:$0x75316420]
    %v604 = vld.sshfl [vmem:[#allocation1 + $0x10] sm:$0xff pattern:$0x75316420]
    %608 = vst [vmem:[#allocation1] ss:$2 sm:$0xff] %v595
    %s609 = scalar_lea.vmem [#allocation1], 16
    %610 = vst [vmem:[%s609] ss:$2 sm:$0xff] %v596
    %v611 = vld.sshfl [vmem:[#allocation1] sm:$0xff pattern:$0x75316420]
    %v612 = vld.sshfl [vmem:[#allocation1 + $0x8] sm:$0xff pattern:$0x75316420]
    %v613 = vld.sshfl [vmem:[#allocation1 + $0x10] sm:$0xff pattern:$0x75316420]
    %617 = vrot.lane.b32.xlu0 %v611, 127
    %v618 = vpop.permute.xlu0 %617
    %619 = vrot.lane.b32.xlu0 %v612, 127
    %v620 = vpop.permute.xlu0 %619
    %621 = vrot.lane.b32.xlu0 %v613, 127
    %v622 = vpop.permute.xlu0 %621
    %v623 = vsel %vm75, %v620, %v622
    %v624 = vsel %vm75, %v618, %v620
    %v625 = vsel %vm75, %v622, %v618
    %626 = vst [vmem:[#allocation1] ss:$2 sm:$0xff] %v595
    %s627 = scalar_lea.vmem [#allocation1], 16
    %628 = vst [vmem:[%s627] ss:$2 sm:$0xff] %v596
    %v629 = vld.sshfl [vmem:[#allocation1] sm:$0xff pattern:$0x75316420]
    %v630 = vld.sshfl [vmem:[#allocation1 + $0x8] sm:$0xff pattern:$0x75316420]
    %v631 = vld.sshfl [vmem:[#allocation1 + $0x10] sm:$0xff pattern:$0x75316420]
    %635 = vrot.lane.b32.xlu0 %v629, 126
    %v636 = vpop.permute.xlu0 %635
    %637 = vrot.lane.b32.xlu0 %v630, 126
    %v638 = vpop.permute.xlu0 %637
    %639 = vrot.lane.b32.xlu0 %v631, 126
    %v640 = vpop.permute.xlu0 %639
    %v641 = vsel %vm94, %v638, %v640
    %v642 = vsel %vm94, %v636, %v638
    %v643 = vsel %vm94, %v640, %v636
    %644 = vst [vmem:[#allocation1] ss:$2 sm:$0xff] %v595
    %s645 = scalar_lea.vmem [#allocation1], 16
    %646 = vst [vmem:[%s645] ss:$2 sm:$0xff] %v596
    %v647 = vld.sshfl [vmem:[#allocation1] sm:$0xff pattern:$0x75316420]
    %v648 = vld.sshfl [vmem:[#allocation1 + $0x8] sm:$0xff pattern:$0x75316420]
    %v649 = vld.sshfl [vmem:[#allocation1 + $0x10] sm:$0xff pattern:$0x75316420]
    %653 = vrot.lane.b32.xlu0 %v647, 110
    %v654 = vpop.permute.xlu0 %653
    %655 = vrot.lane.b32.xlu0 %v648, 110
    %v656 = vpop.permute.xlu0 %655
    %657 = vrot.lane.b32.xlu0 %v649, 110
    %v658 = vpop.permute.xlu0 %657
    %v659 = vsel %vm113, %v656, %v658
    %v660 = vsel %vm113, %v654, %v656
    %v661 = vsel %vm113, %v658, %v654
    %662 = vst [vmem:[#allocation1] ss:$2 sm:$0xff] %v595
    %s663 = scalar_lea.vmem [#allocation1], 16
    %664 = vst [vmem:[%s663] ss:$2 sm:$0xff] %v596
    %v665 = vld.sshfl [vmem:[#allocation1] sm:$0xff pattern:$0x75316420]
    %v666 = vld.sshfl [vmem:[#allocation1 + $0x8] sm:$0xff pattern:$0x75316420]
    %v667 = vld.sshfl [vmem:[#allocation1 + $0x10] sm:$0xff pattern:$0x75316420]
    %671 = vrot.lane.b32.xlu0 %v665, 109
    %v672 = vpop.permute.xlu0 %671
    %673 = vrot.lane.b32.xlu0 %v666, 109
    %v674 = vpop.permute.xlu0 %673
    %675 = vrot.lane.b32.xlu0 %v667, 109
    %v676 = vpop.permute.xlu0 %675
    %v677 = vsel %vm132, %v674, %v676
    %v678 = vsel %vm132, %v672, %v674
    %v679 = vsel %vm132, %v676, %v672
    %680 = vst [vmem:[#allocation1] ss:$2 sm:$0xff] %v595
    %s681 = scalar_lea.vmem [#allocation1], 16
    %682 = vst [vmem:[%s681] ss:$2 sm:$0xff] %v596
    %v683 = vld.sshfl [vmem:[#allocation1] sm:$0xff pattern:$0x75316420]
    %v684 = vld.sshfl [vmem:[#allocation1 + $0x8] sm:$0xff pattern:$0x75316420]
    %v685 = vld.sshfl [vmem:[#allocation1 + $0x10] sm:$0xff pattern:$0x75316420]
    %689 = vrot.lane.b32.xlu0 %v683, 108
    %v690 = vpop.permute.xlu0 %689
    %691 = vrot.lane.b32.xlu0 %v684, 108
    %v692 = vpop.permute.xlu0 %691
    %693 = vrot.lane.b32.xlu0 %v685, 108
    %v694 = vpop.permute.xlu0 %693
    %v695 = vsel %vm151, %v692, %v694
    %v696 = vsel %vm151, %v690, %v692
    %v697 = vsel %vm151, %v694, %v690
    %698 = vst [vmem:[#allocation1] ss:$2 sm:$0xff] %v595
    %s699 = scalar_lea.vmem [#allocation1], 16
    %700 = vst [vmem:[%s699] ss:$2 sm:$0xff] %v596
    %v701 = vld.sshfl [vmem:[#allocation1] sm:$0xff pattern:$0x75316420]
    %v702 = vld.sshfl [vmem:[#allocation1 + $0x8] sm:$0xff pattern:$0x75316420]
    %v703 = vld.sshfl [vmem:[#allocation1 + $0x10] sm:$0xff pattern:$0x75316420]
    %707 = vrot.lane.b32.xlu0 %v701, 92
    %v708 = vpop.permute.xlu0 %707
    %709 = vrot.lane.b32.xlu0 %v702, 92
    %v710 = vpop.permute.xlu0 %709
    %711 = vrot.lane.b32.xlu0 %v703, 92
    %v712 = vpop.permute.xlu0 %711
    %v713 = vsel %vm170, %v710, %v712
    %v714 = vsel %vm170, %v708, %v710
    %v715 = vsel %vm170, %v712, %v708
    %716 = vst [vmem:[#allocation1] ss:$2 sm:$0xff] %v595
    %s717 = scalar_lea.vmem [#allocation1], 16
    %718 = vst [vmem:[%s717] ss:$2 sm:$0xff] %v596
    %v719 = vld.sshfl [vmem:[#allocation1] sm:$0xff pattern:$0x75316420]
    %v720 = vld.sshfl [vmem:[#allocation1 + $0x8] sm:$0xff pattern:$0x75316420]
    %v721 = vld.sshfl [vmem:[#allocation1 + $0x10] sm:$0xff pattern:$0x75316420]
    %725 = vrot.lane.b32.xlu0 %v719, 91
    %v726 = vpop.permute.xlu0 %725
    %727 = vrot.lane.b32.xlu0 %v720, 91
    %v728 = vpop.permute.xlu0 %727
    %729 = vrot.lane.b32.xlu0 %v721, 91
    %v730 = vpop.permute.xlu0 %729
    %v731 = vsel %vm189, %v728, %v730
    %v732 = vsel %vm189, %v726, %v728
    %v733 = vsel %vm189, %v730, %v726
    %734 = vst [vmem:[#allocation1] ss:$2 sm:$0xff] %v595
    %s735 = scalar_lea.vmem [#allocation1], 16
    %736 = vst [vmem:[%s735] ss:$2 sm:$0xff] %v596
    %v737 = vld.sshfl [vmem:[#allocation1] sm:$0xff pattern:$0x75316420]
    %v738 = vld.sshfl [vmem:[#allocation1 + $0x8] sm:$0xff pattern:$0x75316420]
    %v739 = vld.sshfl [vmem:[#allocation1 + $0x10] sm:$0xff pattern:$0x75316420]
    %743 = vrot.lane.b32.xlu0 %v737, 90
    %v744 = vpop.permute.xlu0 %743
    %745 = vrot.lane.b32.xlu0 %v738, 90
    %v746 = vpop.permute.xlu0 %745
    %747 = vrot.lane.b32.xlu0 %v739, 90
    %v748 = vpop.permute.xlu0 %747
    %v749 = vsel %vm208, %v746, %v748
    %v750 = vsel %vm208, %v744, %v746
    %v751 = vsel %vm208, %v748, %v744
    %v755 = vrot.slane %v624, 4
    %v756 = vrot.slane %v623, 4
    %v757 = vrot.slane %v625, 4
    %v764 = vrot.slane %v660, 4
    %v765 = vrot.slane %v659, 4
    %v766 = vrot.slane %v661, 4
    %v773 = vrot.slane %v696, 4
    %v774 = vrot.slane %v695, 4
    %v775 = vrot.slane %v697, 4
    %v782 = vrot.slane %v732, 4
    %v783 = vrot.slane %v731, 4
    %v784 = vrot.slane %v733, 4
    %v788 = vsel %vm248, %v602, %v755
    %v789 = vsel %vm248, %v603, %v756
    %v790 = vsel %vm248, %v604, %v757
    %v791 = vsel %vm248, %v642, %v764
    %v792 = vsel %vm248, %v641, %v765
    %v793 = vsel %vm248, %v643, %v766
    %v794 = vsel %vm248, %v678, %v773
    %v795 = vsel %vm248, %v677, %v774
    %v796 = vsel %vm248, %v679, %v775
    %v797 = vsel %vm248, %v714, %v782
    %v798 = vsel %vm248, %v713, %v783
    %v799 = vsel %vm248, %v715, %v784
    %v801 = vsel %vm248, %v750, 0
    %v804 = vsel %vm248, %v749, 0
    %v807 = vsel %vm248, %v751, 0
    %809 = vmatpush.msra.mxu0 0.0
    %810 = vmatpush.msra.mxu0 0.0
    %811 = vmatpush.msra.mxu0 0.0
    %812 = vmatpush.msra.mxu0 0.0
    %813 = vmatpush.msra.mxu0 0.0
    %814 = vmatpush.msra.mxu0 0.0
    %815 = vmatpush.msra.mxu0 0.0
    %816 = vmatpush.msra.mxu0 0.0
    %817 = vmatpush.msra.mxu0 0.0
    %818 = vmatpush.msra.mxu0 0.0
    %819 = vmatpush.msra.mxu0 0.0
    %820 = vmatpush.msra.mxu0 %v801
    %821 = vmatpush.msra.mxu0 %v797
    %822 = vmatpush.msra.mxu0 %v794
    %823 = vmatpush.msra.mxu0 %v791
    %824 = vmatpush.msra.mxu0 %v788
    %825 = vmatmul.f32.gmra.mxu0 %v263
    %v826 = vpop.f32.mrf.mxu0
    %v827 = vadd.f32 0.0, %v826
    %828 = vdwg.mxu0
    %829 = vmatpush.msra.mxu0 0.0
    %830 = vmatpush.msra.mxu0 0.0
    %831 = vmatpush.msra.mxu0 0.0
    %832 = vmatpush.msra.mxu0 0.0
    %833 = vmatpush.msra.mxu0 0.0
    %834 = vmatpush.msra.mxu0 0.0
    %835 = vmatpush.msra.mxu0 0.0
    %836 = vmatpush.msra.mxu0 0.0
    %837 = vmatpush.msra.mxu0 0.0
    %838 = vmatpush.msra.mxu0 0.0
    %839 = vmatpush.msra.mxu0 0.0
    %840 = vmatpush.msra.mxu0 %v804
    %841 = vmatpush.msra.mxu0 %v798
    %842 = vmatpush.msra.mxu0 %v795
    %843 = vmatpush.msra.mxu0 %v792
    %844 = vmatpush.msra.mxu0 %v789
    %845 = vmatmul.f32.gmra.mxu0 %v263
    %v846 = vpop.f32.mrf.mxu0
    %v847 = vadd.f32 0.0, %v846
    %848 = vdwg.mxu0
    %849 = vmatpush.msra.mxu0 0.0
    %850 = vmatpush.msra.mxu0 0.0
    %851 = vmatpush.msra.mxu0 0.0
    %852 = vmatpush.msra.mxu0 0.0
    %853 = vmatpush.msra.mxu0 0.0
    %854 = vmatpush.msra.mxu0 0.0
    %855 = vmatpush.msra.mxu0 0.0
    %856 = vmatpush.msra.mxu0 0.0
    %857 = vmatpush.msra.mxu0 0.0
    %858 = vmatpush.msra.mxu0 0.0
    %859 = vmatpush.msra.mxu0 0.0
    %860 = vmatpush.msra.mxu0 %v807
    %861 = vmatpush.msra.mxu0 %v799
    %862 = vmatpush.msra.mxu0 %v796
    %863 = vmatpush.msra.mxu0 %v793
    %864 = vmatpush.msra.mxu0 %v790
    %865 = vmatmul.f32.gmra.mxu0 %v263
    %v866 = vpop.f32.mrf.mxu0
    %v867 = vadd.f32 0.0, %v866
    %868 = vdwg.mxu0
    %v869 = vmul.f32 %v827, %v337
    %v870 = vmul.f32 %v847, %v337
    %v871 = vmul.f32 %v867, %v337
    %v872 = vadd.f32 %v869, %v345
    %v873 = vadd.f32 %v870, %v345
    %v874 = vadd.f32 %v871, %v345
    %v875 = vmax.f32 %v872, 0.0
    %v876 = vmax.f32 %v873, 0.0
    %v877 = vmax.f32 %v874, 0.0
    %v878 = vmul.f32 %v875, %v354
    %v879 = vmul.f32 %v876, %v355
    %v880 = vmul.f32 %v877, %v356
    %881 = vrot.lane.b32.xlu0 %v878, 19
    %v882 = vpop.permute.xlu0 %881
    %883 = vrot.lane.b32.xlu0 %v879, 19
    %v884 = vpop.permute.xlu0 %883
    %885 = vrot.lane.b32.xlu0 %v880, 19
    %v886 = vpop.permute.xlu0 %885
    %v887 = vsel %vm369, %v884, %v886
    %v888 = vsel %vm369, %v882, %v884
    %v889 = vsel %vm369, %v886, %v882
    %890 = vrot.lane.b32.xlu0 %v889, 127
    %v891 = vpop.permute.xlu0 %890
    %892 = vrot.lane.b32.xlu0 %v888, 127
    %v893 = vpop.permute.xlu0 %892
    %894 = vrot.lane.b32.xlu0 %v887, 127
    %v895 = vpop.permute.xlu0 %894
    %v896 = vsel %vm75, %v893, %v895
    %v897 = vsel %vm75, %v891, %v893
    %v898 = vsel %vm75, %v895, %v891
    %899 = vrot.lane.b32.xlu0 %v889, 126
    %v900 = vpop.permute.xlu0 %899
    %901 = vrot.lane.b32.xlu0 %v888, 126
    %v902 = vpop.permute.xlu0 %901
    %903 = vrot.lane.b32.xlu0 %v887, 126
    %v904 = vpop.permute.xlu0 %903
    %v905 = vsel %vm94, %v902, %v904
    %v906 = vsel %vm94, %v900, %v902
    %v907 = vsel %vm94, %v904, %v900
    %908 = vrot.lane.b32.xlu0 %v889, 110
    %v909 = vpop.permute.xlu0 %908
    %910 = vrot.lane.b32.xlu0 %v888, 110
    %v911 = vpop.permute.xlu0 %910
    %912 = vrot.lane.b32.xlu0 %v887, 110
    %v913 = vpop.permute.xlu0 %912
    %v914 = vsel %vm113, %v911, %v913
    %v915 = vsel %vm113, %v909, %v911
    %v916 = vsel %vm113, %v913, %v909
    %917 = vrot.lane.b32.xlu0 %v889, 109
    %v918 = vpop.permute.xlu0 %917
    %919 = vrot.lane.b32.xlu0 %v888, 109
    %v920 = vpop.permute.xlu0 %919
    %921 = vrot.lane.b32.xlu0 %v887, 109
    %v922 = vpop.permute.xlu0 %921
    %v923 = vsel %vm132, %v920, %v922
    %v924 = vsel %vm132, %v918, %v920
    %v925 = vsel %vm132, %v922, %v918
    %926 = vrot.lane.b32.xlu0 %v889, 108
    %v927 = vpop.permute.xlu0 %926
    %928 = vrot.lane.b32.xlu0 %v888, 108
    %v929 = vpop.permute.xlu0 %928
    %930 = vrot.lane.b32.xlu0 %v887, 108
    %v931 = vpop.permute.xlu0 %930
    %v932 = vsel %vm151, %v929, %v931
    %v933 = vsel %vm151, %v927, %v929
    %v934 = vsel %vm151, %v931, %v927
    %935 = vrot.lane.b32.xlu0 %v889, 92
    %v936 = vpop.permute.xlu0 %935
    %937 = vrot.lane.b32.xlu0 %v888, 92
    %v938 = vpop.permute.xlu0 %937
    %939 = vrot.lane.b32.xlu0 %v887, 92
    %v940 = vpop.permute.xlu0 %939
    %v941 = vsel %vm170, %v938, %v940
    %v942 = vsel %vm170, %v936, %v938
    %v943 = vsel %vm170, %v940, %v936
    %944 = vrot.lane.b32.xlu0 %v889, 91
    %v945 = vpop.permute.xlu0 %944
    %946 = vrot.lane.b32.xlu0 %v888, 91
    %v947 = vpop.permute.xlu0 %946
    %948 = vrot.lane.b32.xlu0 %v887, 91
    %v949 = vpop.permute.xlu0 %948
    %v950 = vsel %vm189, %v947, %v949
    %v951 = vsel %vm189, %v945, %v947
    %v952 = vsel %vm189, %v949, %v945
    %953 = vrot.lane.b32.xlu0 %v889, 90
    %v954 = vpop.permute.xlu0 %953
    %955 = vrot.lane.b32.xlu0 %v888, 90
    %v956 = vpop.permute.xlu0 %955
    %957 = vrot.lane.b32.xlu0 %v887, 90
    %v958 = vpop.permute.xlu0 %957
    %v959 = vsel %vm208, %v956, %v958
    %v960 = vsel %vm208, %v954, %v956
    %v961 = vsel %vm208, %v958, %v954
    %v965 = vrot.slane %v897, 4
    %v966 = vrot.slane %v896, 4
    %v967 = vrot.slane %v898, 4
    %v974 = vrot.slane %v915, 4
    %v975 = vrot.slane %v914, 4
    %v976 = vrot.slane %v916, 4
    %v983 = vrot.slane %v933, 4
    %v984 = vrot.slane %v932, 4
    %v985 = vrot.slane %v934, 4
    %v992 = vrot.slane %v951, 4
    %v993 = vrot.slane %v950, 4
    %v994 = vrot.slane %v952, 4
    %v998 = vsel %vm248, %v889, %v965
    %v999 = vsel %vm248, %v888, %v966
    %v1000 = vsel %vm248, %v887, %v967
    %v1001 = vsel %vm248, %v906, %v974
    %v1002 = vsel %vm248, %v905, %v975
    %v1003 = vsel %vm248, %v907, %v976
    %v1004 = vsel %vm248, %v924, %v983
    %v1005 = vsel %vm248, %v923, %v984
    %v1006 = vsel %vm248, %v925, %v985
    %v1007 = vsel %vm248, %v942, %v992
    %v1008 = vsel %vm248, %v941, %v993
    %v1009 = vsel %vm248, %v943, %v994
    %v1011 = vsel %vm248, %v960, 0
    %v1014 = vsel %vm248, %v959, 0
    %v1017 = vsel %vm248, %v961, 0
    %1019 = vmatpush.msra.mxu0 0.0
    %1020 = vmatpush.msra.mxu0 0.0
    %1021 = vmatpush.msra.mxu0 0.0
    %1022 = vmatpush.msra.mxu0 0.0
    %1023 = vmatpush.msra.mxu0 0.0
    %1024 = vmatpush.msra.mxu0 0.0
    %1025 = vmatpush.msra.mxu0 0.0
    %1026 = vmatpush.msra.mxu0 0.0
    %1027 = vmatpush.msra.mxu0 0.0
    %1028 = vmatpush.msra.mxu0 0.0
    %1029 = vmatpush.msra.mxu0 0.0
    %1030 = vmatpush.msra.mxu0 %v1011
    %1031 = vmatpush.msra.mxu0 %v1007
    %1032 = vmatpush.msra.mxu0 %v1004
    %1033 = vmatpush.msra.mxu0 %v1001
    %1034 = vmatpush.msra.mxu0 %v998
    %1035 = vmatmul.f32.gmra.mxu0 %v494
    %v1036 = vpop.f32.mrf.mxu0
    %v1037 = vadd.f32 0.0, %v1036
    %1038 = vdwg.mxu0
    %1039 = vmatpush.msra.mxu0 0.0
    %1040 = vmatpush.msra.mxu0 0.0
    %1041 = vmatpush.msra.mxu0 0.0
    %1042 = vmatpush.msra.mxu0 0.0
    %1043 = vmatpush.msra.mxu0 0.0
    %1044 = vmatpush.msra.mxu0 0.0
    %1045 = vmatpush.msra.mxu0 0.0
    %1046 = vmatpush.msra.mxu0 0.0
    %1047 = vmatpush.msra.mxu0 0.0
    %1048 = vmatpush.msra.mxu0 0.0
    %1049 = vmatpush.msra.mxu0 0.0
    %1050 = vmatpush.msra.mxu0 %v1014
    %1051 = vmatpush.msra.mxu0 %v1008
    %1052 = vmatpush.msra.mxu0 %v1005
    %1053 = vmatpush.msra.mxu0 %v1002
    %1054 = vmatpush.msra.mxu0 %v999
    %1055 = vmatmul.f32.gmra.mxu0 %v494
    %v1056 = vpop.f32.mrf.mxu0
    %v1057 = vadd.f32 0.0, %v1056
    %1058 = vdwg.mxu0
    %1059 = vmatpush.msra.mxu0 0.0
    %1060 = vmatpush.msra.mxu0 0.0
    %1061 = vmatpush.msra.mxu0 0.0
    %1062 = vmatpush.msra.mxu0 0.0
    %1063 = vmatpush.msra.mxu0 0.0
    %1064 = vmatpush.msra.mxu0 0.0
    %1065 = vmatpush.msra.mxu0 0.0
    %1066 = vmatpush.msra.mxu0 0.0
    %1067 = vmatpush.msra.mxu0 0.0
    %1068 = vmatpush.msra.mxu0 0.0
    %1069 = vmatpush.msra.mxu0 0.0
    %1070 = vmatpush.msra.mxu0 %v1017
    %1071 = vmatpush.msra.mxu0 %v1009
    %1072 = vmatpush.msra.mxu0 %v1006
    %1073 = vmatpush.msra.mxu0 %v1003
    %1074 = vmatpush.msra.mxu0 %v1000
    %1075 = vmatmul.f32.gmra.mxu0 %v494
    %v1076 = vpop.f32.mrf.mxu0
    %v1077 = vadd.f32 0.0, %v1076
    %1078 = vdwg.mxu0
    %v1079 = vmul.f32 %v1037, %v568
    %v1080 = vmul.f32 %v1057, %v568
    %v1081 = vmul.f32 %v1077, %v568
    %v1082 = vadd.f32 %v1079, %v576
    %v1083 = vadd.f32 %v1080, %v576
    %v1084 = vadd.f32 %v1081, %v576
    %v1085 = vadd.f32 %v1082, %v678
    %v1086 = vadd.f32 %v1083, %v677
    %v1087 = vadd.f32 %v1084, %v679
    %v1088 = vmax.f32 %v1085, 0.0
    %v1089 = vmax.f32 %v1086, 0.0
    %v1090 = vmax.f32 %v1087, 0.0
    %v1093 = vrot.slane %v1089, 4
    %v1094 = vsel %vm248, %v1088, %v1093
    %s1096 = scalar_lea.vmem [#allocation5], 12
    %1097 = vst [vmem:[%s1096] sm:$0xff] %v1094
    %1098 = vst [vmem:[%s1096 + $0x8] sm:$0xf] %v1090
    // Predicated region
    $region22: #{tpu_custom_call.1} parent=1 // pred_check
      _
    $region23: #{tpu_custom_call.1} parent=1 // pred_check_branch
      %1100 = sbr.rel (0) target = $region25
    $region24: #{tpu_custom_call.1} parent=1 // pred_region
      %1102 = vsyncadd [#allocation4], 0
      %s1103 = sshll.u32 [#allocation5], 4
      %s1104 = int_to_ptr.vmem [resolvable:$true] %s1103
      %s1105 = sshll.u32 %s4, 4
      %s1106 = int_to_ptr.hbm [resolvable:$true] %s1105
      %1111 = dma.vmem_to_hbm [thread:$0]  %s1104, 384, %s1106, [#allocation4], 192, 192, 12
    $region25: #{tpu_custom_call.1} parent=1 // pred_fallthru
      _
    // Predicated region
    $region26: #{tpu_custom_call.1} parent=1 // pred_check
      _
    $region27: #{tpu_custom_call.1} parent=1 // pred_check_branch
      %1113 = sbr.rel (0) target = $region29
    $region28: #{tpu_custom_call.1} parent=1 // pred_region
      %1115 = dma.done [#allocation4], 384
    $region29: #{tpu_custom_call.1} parent=1 // pred_fallthru
      _
    %1116 = vsyncpa [#allocation3], 1
    %1117 = vsyncpa [#allocation4], 1

</llo_original>
